<compile_context>
chip_gen: v7x
topology: tpu7x:2x2x1
jax: 0.10.0
libtpu: 0.0.40
codegen_flags: <defaults>
</compile_context>

<pallas_src>
import functools

import numpy as np
import jax
import jax.numpy as jnp
from jax.experimental import pallas as pl
from jax.experimental.pallas import tpu as pltpu

LANES = 128  # all channel axes are zero-padded to this -> lane-dense loads/stores


# ----------------------------------------------------------------------------
# Pallas kernels
# ----------------------------------------------------------------------------
def conv_s2d_kernel(x_ref, w_ref, b_ref, o_ref, *, ws, act):
    """Fused conv (space-to-depth form of a 3x3/stride-2 conv) + bias + SiLU.

    x_ref: (1, Ls, Cs)  flattened space-to-depth input rows (row = h*ws + w), bf16
    w_ref: (4, Cs, Cp)  per-tap weight matrices (tap = di*2 + dj), bf16
    b_ref: (1, Cp)      bias, f32
    o_ref: (1, Lo, Cp)  output rows, Lo = Ho*ws (padding column trimmed outside)
    """
    lo = o_ref.shape[1]
    cp = o_ref.shape[2]
    acc = jnp.zeros((lo, cp), jnp.float32)
    # Shift-accumulate over the 4 taps: each tap's window is one contiguous
    # row-slice of the flattened s2d input (no im2col, no in-kernel reshape).
    for di in range(2):
        for dj in range(2):
            off = di * ws + dj
            acc += jnp.dot(x_ref[0, off:off + lo, :],
                           w_ref[di * 2 + dj],
                           preferred_element_type=jnp.float32)
    acc = acc + b_ref[...]
    if act:
        acc = acc * jax.nn.sigmoid(acc)          # SiLU, kept in f32 (v5e-safe)
    o_ref[0] = acc.astype(o_ref.dtype)


def detect_head_kernel(x_ref, w_ref, b_ref, kind_ref, anch_ref,
                       raw_ref, z_ref, *, nx, stride):
    """Fused Detect head: 1x1 conv + bias + sigmoid + YOLOv5 box decode.

    x_ref:    (1, S, Ci)  features, one batch element (S = ny*nx), bf16
    w_ref:    (Ci, Cp)    1x1-conv weight (lane-padded), bf16
    b_ref:    (1, Cp)     bias, f32
    kind_ref: (1, Cp) i32 per-column kind: 0=x-center, 1=y-center, 2=wh, 3=raw/pad
    anch_ref: (1, Cp) f32 per-column anchor size (only kind==2 columns used)
    raw_ref:  (1, S, Cp)  raw (pre-sigmoid) logits  -> x_raw
    z_ref:    (1, S, Cp)  decoded predictions       -> z
    """
    logits = jnp.dot(x_ref[0], w_ref[...],
                     preferred_element_type=jnp.float32) + b_ref[...]
    raw_ref[0] = logits.astype(raw_ref.dtype)

    s, cp = logits.shape
    sig = jax.nn.sigmoid(logits)
    # Grid offsets computed in-kernel from the row index (float trick avoids
    # vector integer div): row = y*nx + x.
    row = jax.lax.broadcasted_iota(jnp.int32, (s, cp), 0).astype(jnp.float32)
    yi = jnp.floor((row + 0.5) * (1.0 / nx))
    xi = row - yi * nx
    kind = kind_ref[...]                          # (1, Cp), broadcasts over rows
    offs = jnp.where(kind == 0, xi, yi)
    xy = (sig * 2.0 - 0.5 + offs) * stride        # box centers (pixels)
    wh = (sig * 2.0) ** 2 * anch_ref[...]         # box sizes   (pixels)
    z = jnp.where(kind < 2, xy, jnp.where(kind == 2, wh, sig))
    z_ref[0] = z.astype(z_ref.dtype)


# ----------------------------------------------------------------------------
# pallas_call wrappers
# ----------------------------------------------------------------------------
def _mosaic_params(block_bytes):
    # explicit VMEM budget (v7x has only 64 MiB physical / 32 MiB scoped default)
    vmem = int(min(32 << 20, max(4 << 20, 8 * block_bytes)))
    return pltpu.CompilerParams(dimension_semantics=("parallel",),
                                vmem_limit_bytes=vmem)


def pallas_conv_s2d(x_flat, w_taps, bias, *, ho, ws, act, out_dtype=jnp.bfloat16):
    """3x3/stride-2 conv (+SiLU) on a flattened space-to-depth input.
    Grid over batch ("parallel" -> both TensorCores on v7x)."""
    n, ls, cs = x_flat.shape
    t, _, cp = w_taps.shape
    lo = ho * ws
    block_bytes = (ls * cs * x_flat.dtype.itemsize
                   + t * cs * cp * w_taps.dtype.itemsize
                   + cp * 4 + lo * cp * jnp.dtype(out_dtype).itemsize)
    cost = pl.CostEstimate(
        flops=int(2 * n * t * lo * cs * cp),
        transcendentals=int(n * lo * cp) if act else 0,
        bytes_accessed=int(n * (ls * cs * x_flat.dtype.itemsize
                                + lo * cp * jnp.dtype(out_dtype).itemsize)
                           + t * cs * cp * w_taps.dtype.itemsize + cp * 4))
    return pl.pallas_call(
        functools.partial(conv_s2d_kernel, ws=ws, act=act),
        out_shape=jax.ShapeDtypeStruct((n, lo, cp), out_dtype),
        grid=(n,),
        in_specs=[
            pl.BlockSpec((1, ls, cs), lambda i: (i, 0, 0)),
            pl.BlockSpec((t, cs, cp), lambda i: (0, 0, 0)),   # weights stay resident
            pl.BlockSpec((1, cp), lambda i: (0, 0)),
        ],
        out_specs=pl.BlockSpec((1, lo, cp), lambda i: (i, 0, 0)),
        compiler_params=_mosaic_params(block_bytes),
        cost_estimate=cost,
    )(x_flat, w_taps, bias)


def pallas_detect_head(x_flat, w, bias, col_kind, anchor_vec, *, nx, stride):
    """Fused 1x1 conv + sigmoid + box decode. Two lane-dense (·, 128) outputs."""
    n, s, cin = x_flat.shape
    cp = w.shape[1]
    block_bytes = (s * cin * x_flat.dtype.itemsize + cin * cp * w.dtype.itemsize
                   + 3 * cp * 4 + 2 * s * cp * 4)
    cost = pl.CostEstimate(
        flops=int(2 * n * s * cin * cp),
        transcendentals=int(n * s * cp),
        bytes_accessed=int(n * (s * cin * x_flat.dtype.itemsize + 2 * s * cp * 4)
                           + cin * cp * w.dtype.itemsize + 3 * cp * 4))
    raw, z = pl.pallas_call(
        functools.partial(detect_head_kernel, nx=nx, stride=float(stride)),
        out_shape=(jax.ShapeDtypeStruct((n, s, cp), jnp.float32),
                   jax.ShapeDtypeStruct((n, s, cp), jnp.float32)),
        grid=(n,),
        in_specs=[
            pl.BlockSpec((1, s, cin), lambda i: (i, 0, 0)),
            pl.BlockSpec((cin, cp), lambda i: (0, 0)),
            pl.BlockSpec((1, cp), lambda i: (0, 0)),
            pl.BlockSpec((1, cp), lambda i: (0, 0)),
            pl.BlockSpec((1, cp), lambda i: (0, 0)),
        ],
        out_specs=(pl.BlockSpec((1, s, cp), lambda i: (i, 0, 0)),
                   pl.BlockSpec((1, s, cp), lambda i: (i, 0, 0))),
        compiler_params=_mosaic_params(block_bytes),
        cost_estimate=cost,
    )(x_flat, w, bias, col_kind, anchor_vec)
    return raw, z


# ----------------------------------------------------------------------------
# Glue: space-to-depth packing of inputs / weights (layout plumbing, no 9x blowup)
# ----------------------------------------------------------------------------
def _s2d_input(x_nhwc, pad=1):
    """Pad + space-to-depth a NHWC tensor for a 3x3/stride-2 conv, then flatten
    spatial dims (plus one extra zero row so each tap window is a single
    contiguous row-slice inside the kernel). Returns (flat, ws)."""
    n, h, w, c = x_nhwc.shape
    ph = pad + (h + 2 * pad) % 2
    pw = pad + (w + 2 * pad) % 2
    xp = jnp.pad(x_nhwc, ((0, 0), (pad, ph), (pad, pw), (0, 0)))
    hp, wp = h + pad + ph, w + pad + pw
    hs, ws = hp // 2, wp // 2
    x = xp.reshape(n, hs, 2, ws, 2, c)
    x = jnp.transpose(x, (0, 1, 3, 2, 4, 5)).reshape(n, hs, ws, 4 * c)
    x = jnp.pad(x, ((0, 0), (0, 1), (0, 0), (0, 0)))      # one extra zero row
    return x.reshape(n, (hs + 1) * ws, 4 * c), ws


def _conv3x3_s2d_weight(w_oihw, cin_pad, cout_pad):
    """(Cout, Cin, 3, 3) torch-layout conv weight -> (4, 4*cin_pad, cout_pad)
    per-tap matrices matching the space-to-depth input channel order."""
    cout, cin, kh, kw = w_oihw.shape
    w = jnp.transpose(w_oihw, (2, 3, 1, 0))                       # (3,3,cin,cout)
    w = jnp.pad(w, ((0, 0), (0, 0), (0, cin_pad - cin), (0, cout_pad - cout)))
    w2 = jnp.zeros((2, 2, 2, 2, cin_pad, cout_pad), w.dtype)      # (di,dj,p,q,ci,co)
    for i in range(kh):
        for j in range(kw):
            di, p = divmod(i, 2)
            dj, q = divmod(j, 2)
            w2 = w2.at[di, dj, p, q].set(w[i, j])
    return w2.reshape(4, 4 * cin_pad, cout_pad)


# ----------------------------------------------------------------------------
# DetectMultiBackend equivalent
# ----------------------------------------------------------------------------
class DetectMultiBackendPallas:
    """Synthetic, deterministic fused YOLOv5-style model (fp16=False).
    TODO(synk): the real checkpoint (yolov5s.pt) cannot be read here; weights are
    generated deterministically with the same layer structure/semantics."""

    def __init__(self, in_ch=4, nc=2, na=3, fp16=False, seed=0):
        self.fp16 = fp16                       # fp16 branch unused (default False)
        self.nc, self.na, self.no = nc, na, nc + 5
        key = jax.random.PRNGKey(seed)
        k = iter(jax.random.split(key, 8))
        c1, c2 = 8, 16
        # fused Conv blocks (conv+BN already folded -> conv + bias)
        self.w1 = jax.random.normal(next(k), (c1, in_ch, 3, 3), jnp.float32) * 0.1
        self.b1 = jax.random.normal(next(k), (c1,), jnp.float32) * 0.01
        self.w2 = jax.random.normal(next(k), (c2, c1, 3, 3), jnp.float32) * 0.1
        self.b2 = jax.random.normal(next(k), (c2,), jnp.float32) * 0.01
        # Detect head: 1x1 conv -> na*(nc+5) channels, channel index = a*no + o
        self.wd = jax.random.normal(next(k), (na * self.no, c2, 1, 1), jnp.float32) * 0.1
        self.bd = jax.random.normal(next(k), (na * self.no,), jnp.float32) * 0.01
        anchors = [[4.0, 5.0], [8.0, 10.0], [12.0, 6.0]]           # pixel anchors
        self.anchors = jnp.array(anchors, jnp.float32)

        # ---- pre-packed, lane-padded (128) kernel parameters (bf16 on the MXU) ---
        cp = LANES
        self.w1_t = _conv3x3_s2d_weight(self.w1, in_ch, cp).astype(jnp.bfloat16)
        self.b1_p = jnp.pad(self.b1, (0, cp - c1)).reshape(1, cp)
        self.w2_t = _conv3x3_s2d_weight(self.w2, cp, cp).astype(jnp.bfloat16)
        self.b2_p = jnp.pad(self.b2, (0, cp - c2)).reshape(1, cp)
        wd2 = self.wd.reshape(na * self.no, c2).T                   # (c2, na*no)
        self.wd_p = jnp.pad(wd2, ((0, cp - c2), (0, cp - na * self.no))
                            ).astype(jnp.bfloat16)
        self.bd_p = jnp.pad(self.bd, (0, cp - na * self.no)).reshape(1, cp)

        # Per-column decode metadata (replaces the old zero-padded (M, no)
        # grid/anchor tensors): kind 0=x, 1=y, 2=wh, 3=raw-sigmoid/padding.
        kind = np.full((cp,), 3, np.int32)
        anch = np.zeros((cp,), np.float32)
        for c in range(na * self.no):
            a, o = divmod(c, self.no)
            if o == 0:
                kind[c] = 0
            elif o == 1:
                kind[c] = 1
            elif o in (2, 3):
                kind[c] = 2
                anch[c] = anchors[a][o - 2]
        self.col_kind = jnp.asarray(kind).reshape(1, cp)
        self.anchor_vec = jnp.asarray(anch).reshape(1, cp)

    def forward(self, im_nchw):
        # TODO(synk): fp16 cast branch (`im = im.half()`) skipped since fp16=False.
        na, no, cp = self.na, self.no, LANES
        x = jnp.transpose(im_nchw.astype(jnp.float32), (0, 2, 3, 1))  # NCHW -> NHWC
        n, h, w, _ = x.shape

        # Conv1: 3x3 s2 p1 + SiLU (space-to-depth -> fused shift-accumulate kernel)
        ho1, wo1 = (h - 1) // 2 + 1, (w - 1) // 2 + 1
        xf, ws1 = _s2d_input(x.astype(jnp.bfloat16))
        h1 = pallas_conv_s2d(xf, self.w1_t, self.b1_p, ho=ho1, ws=ws1, act=True)
        h1 = h1.reshape(n, ho1, ws1, cp)[:, :, :wo1, :]               # trim pad col

        # Conv2: 3x3 s2 p1 + SiLU
        ho2, wo2 = (ho1 - 1) // 2 + 1, (wo1 - 1) // 2 + 1
        xf, ws2 = _s2d_input(h1)
        h2 = pallas_conv_s2d(xf, self.w2_t, self.b2_p, ho=ho2, ws=ws2, act=True)
        h2 = h2.reshape(n, ho2, ws2, cp)[:, :, :wo2, :]

        # Fused Detect head: 1x1 conv + bias + sigmoid + box decode (one kernel,
        # no HBM round trip of the logits, lane-dense (S, 128) outputs).
        ny, nx = ho2, wo2
        det_stride = im_nchw.shape[2] // ny
        feats = h2.reshape(n, ny * nx, cp)
        raw, z = pallas_detect_head(feats, self.wd_p, self.bd_p,
                                    self.col_kind, self.anchor_vec,
                                    nx=nx, stride=det_stride)

        # layout plumbing (XLA glue) back to the torch reference layouts
        raw = raw[:, :, :na * no].reshape(n, ny, nx, na, no)
        x_raw = jnp.transpose(raw, (0, 3, 1, 2, 4))                   # (bs,na,ny,nx,no)
        z = z[:, :, :na * no].reshape(n, ny, nx, na, no)
        z = jnp.transpose(z, (0, 3, 1, 2, 4)).reshape(n, na * ny * nx, no)
        # DetectMultiBackend.forward: y is a tuple of len 2 -> list of both.
        return [z, x_raw]

    __call__ = forward


if __name__ == "__main__":
    key = jax.random.PRNGKey(0)
    x = jax.random.normal(key, (2, 4, 16, 16), jnp.float32)   # NCHW like PyTorch

    model = DetectMultiBackendPallas(in_ch=4, nc=2, na=3)
    z, x_raw = model(x)
    z = jax.block_until_ready(z)
    x_raw = jax.block_until_ready(x_raw)

    assert z.shape == (2, 3 * 4 * 4, 7), z.shape
    assert x_raw.shape == (2, 3, 4, 4, 7), x_raw.shape
    assert bool(jnp.all(jnp.isfinite(z))) and bool(jnp.all(jnp.isfinite(x_raw)))
    print("KERNEL_OK")
</pallas_src>

<mosaic_0001>
module attributes {stable_mosaic.version = 11 : i64} {
  func.func @conv_s2d_kernel(%arg0: i32, %arg1: memref<1x90x16xbf16, #tpu.memory_space<vmem>>, %arg2: memref<4x16x128xbf16, #tpu.memory_space<vmem>>, %arg3: memref<1x128xf32, #tpu.memory_space<vmem>>, %arg4: memref<1x72x128xbf16, #tpu.memory_space<vmem>>) attributes {dimension_semantics = [#tpu.dimension_semantics<parallel>], iteration_bounds = array<i64: 2>, scalar_prefetch = 0 : i64, scratch_operands = 0 : i64, tpu.core_type = #tpu.core_type<tc>, window_params = [{transform_indices = @transform_0, window_bounds = array<i64: 1, 90, 16>}, {pipeline_mode = #tpu.pipeline_mode<synchronous>, transform_indices = @transform_1, window_bounds = array<i64: 4, 16, 128>}, {pipeline_mode = #tpu.pipeline_mode<synchronous>, transform_indices = @transform_2, window_bounds = array<i64: 1, 128>}, {transform_indices = @transform_3, window_bounds = array<i64: 1, 72, 128>}]} {
    %cst = arith.constant 0.000000e+00 : f32
    %0 = vector.broadcast %cst : f32 to vector<72x128xf32>
    %c0 = arith.constant 0 : index
    %c0_0 = arith.constant 0 : index
    %c0_1 = arith.constant 0 : index
    %1 = vector.load %arg1[%c0, %c0_0, %c0_1] : memref<1x90x16xbf16, #tpu.memory_space<vmem>>, vector<1x72x16xbf16>
    %2 = vector.shape_cast %1 : vector<1x72x16xbf16> to vector<72x16xbf16>
    %c0_2 = arith.constant 0 : index
    %c0_3 = arith.constant 0 : index
    %c0_4 = arith.constant 0 : index
    %3 = vector.load %arg2[%c0_2, %c0_3, %c0_4] : memref<4x16x128xbf16, #tpu.memory_space<vmem>>, vector<1x16x128xbf16>
    %4 = vector.shape_cast %3 : vector<1x16x128xbf16> to vector<16x128xbf16>
    %cst_5 = arith.constant dense<0.000000e+00> : vector<72x128xf32>
    %5 = tpu.matmul %2, %4, %cst_5 {dimension_numbers = #tpu.dot_dimension_numbers<[1], [0], [0], [1], [0, 0, 1, 1], [], []>} : vector<72x16xbf16>, vector<16x128xbf16>, vector<72x128xf32> -> vector<72x128xf32>
    %6 = arith.addf %0, %5 : vector<72x128xf32>
    %c0_6 = arith.constant 0 : index
    %c1 = arith.constant 1 : index
    %c0_7 = arith.constant 0 : index
    %7 = vector.load %arg1[%c0_6, %c1, %c0_7] : memref<1x90x16xbf16, #tpu.memory_space<vmem>>, vector<1x72x16xbf16>
    %8 = vector.shape_cast %7 : vector<1x72x16xbf16> to vector<72x16xbf16>
    %c1_8 = arith.constant 1 : index
    %c0_9 = arith.constant 0 : index
    %c0_10 = arith.constant 0 : index
    %9 = vector.load %arg2[%c1_8, %c0_9, %c0_10] : memref<4x16x128xbf16, #tpu.memory_space<vmem>>, vector<1x16x128xbf16>
    %10 = vector.shape_cast %9 : vector<1x16x128xbf16> to vector<16x128xbf16>
    %cst_11 = arith.constant dense<0.000000e+00> : vector<72x128xf32>
    %11 = tpu.matmul %8, %10, %cst_11 {dimension_numbers = #tpu.dot_dimension_numbers<[1], [0], [0], [1], [0, 0, 1, 1], [], []>} : vector<72x16xbf16>, vector<16x128xbf16>, vector<72x128xf32> -> vector<72x128xf32>
    %12 = arith.addf %6, %11 : vector<72x128xf32>
    %c0_12 = arith.constant 0 : index
    %c9 = arith.constant 9 : index
    %c0_13 = arith.constant 0 : index
    %13 = vector.load %arg1[%c0_12, %c9, %c0_13] : memref<1x90x16xbf16, #tpu.memory_space<vmem>>, vector<1x72x16xbf16>
    %14 = vector.shape_cast %13 : vector<1x72x16xbf16> to vector<72x16xbf16>
    %c2 = arith.constant 2 : index
    %c0_14 = arith.constant 0 : index
    %c0_15 = arith.constant 0 : index
    %15 = vector.load %arg2[%c2, %c0_14, %c0_15] : memref<4x16x128xbf16, #tpu.memory_space<vmem>>, vector<1x16x128xbf16>
    %16 = vector.shape_cast %15 : vector<1x16x128xbf16> to vector<16x128xbf16>
    %cst_16 = arith.constant dense<0.000000e+00> : vector<72x128xf32>
    %17 = tpu.matmul %14, %16, %cst_16 {dimension_numbers = #tpu.dot_dimension_numbers<[1], [0], [0], [1], [0, 0, 1, 1], [], []>} : vector<72x16xbf16>, vector<16x128xbf16>, vector<72x128xf32> -> vector<72x128xf32>
    %18 = arith.addf %12, %17 : vector<72x128xf32>
    %c0_17 = arith.constant 0 : index
    %c10 = arith.constant 10 : index
    %c0_18 = arith.constant 0 : index
    %19 = vector.load %arg1[%c0_17, %c10, %c0_18] : memref<1x90x16xbf16, #tpu.memory_space<vmem>>, vector<1x72x16xbf16>
    %20 = vector.shape_cast %19 : vector<1x72x16xbf16> to vector<72x16xbf16>
    %c3 = arith.constant 3 : index
    %c0_19 = arith.constant 0 : index
    %c0_20 = arith.constant 0 : index
    %21 = vector.load %arg2[%c3, %c0_19, %c0_20] : memref<4x16x128xbf16, #tpu.memory_space<vmem>>, vector<1x16x128xbf16>
    %22 = vector.shape_cast %21 : vector<1x16x128xbf16> to vector<16x128xbf16>
    %cst_21 = arith.constant dense<0.000000e+00> : vector<72x128xf32>
    %23 = tpu.matmul %20, %22, %cst_21 {dimension_numbers = #tpu.dot_dimension_numbers<[1], [0], [0], [1], [0, 0, 1, 1], [], []>} : vector<72x16xbf16>, vector<16x128xbf16>, vector<72x128xf32> -> vector<72x128xf32>
    %24 = arith.addf %18, %23 : vector<72x128xf32>
    %c0_22 = arith.constant 0 : index
    %c0_23 = arith.constant 0 : index
    %25 = vector.load %arg3[%c0_22, %c0_23] : memref<1x128xf32, #tpu.memory_space<vmem>>, vector<1x128xf32>
    %26 = vector.broadcast %25 : vector<1x128xf32> to vector<72x128xf32>
    %27 = arith.addf %24, %26 : vector<72x128xf32>
    %28 = arith.negf %27 : vector<72x128xf32>
    %29 = math.exp %28 : vector<72x128xf32>
    %cst_24 = arith.constant 1.000000e+00 : f32
    %30 = vector.broadcast %cst_24 : f32 to vector<72x128xf32>
    %31 = arith.addf %30, %29 : vector<72x128xf32>
    %32 = arith.divf %30, %31 : vector<72x128xf32>
    %33 = arith.mulf %27, %32 : vector<72x128xf32>
    %34 = arith.truncf %33 : vector<72x128xf32> to vector<72x128xbf16>
    %c0_25 = arith.constant 0 : index
    %c0_26 = arith.constant 0 : index
    %c0_27 = arith.constant 0 : index
    %35 = vector.load %arg4[%c0_25, %c0_26, %c0_27] : memref<1x72x128xbf16, #tpu.memory_space<vmem>>, vector<1x72x128xbf16>
    %36 = vector.shape_cast %35 : vector<1x72x128xbf16> to vector<72x128xbf16>
    %37 = vector.shape_cast %34 : vector<72x128xbf16> to vector<1x72x128xbf16>
    tpu.vector_store %arg4[%c0_25, %c0_26, %c0_27], %37 {strides = array<i32>} : memref<1x72x128xbf16, #tpu.memory_space<vmem>>, vector<1x72x128xbf16>,
    return
  }
  func.func @transform_0(%arg0: i32) -> (i32, i32, i32) {
    %c0_i32 = arith.constant 0 : i32
    %c0_i32_0 = arith.constant 0 : i32
    %c0_i32_1 = arith.constant 0 : i32
    return %arg0, %c0_i32, %c0_i32_0 : i32, i32, i32
  }
  func.func @transform_1(%arg0: i32) -> (i32, i32, i32) {
    %c0_i32 = arith.constant 0 : i32
    %c0_i32_0 = arith.constant 0 : i32
    %c0_i32_1 = arith.constant 0 : i32
    %c0_i32_2 = arith.constant 0 : i32
    return %c0_i32, %c0_i32_0, %c0_i32_1 : i32, i32, i32
  }
  func.func @transform_2(%arg0: i32) -> (i32, i32) {
    %c0_i32 = arith.constant 0 : i32
    %c0_i32_0 = arith.constant 0 : i32
    %c0_i32_1 = arith.constant 0 : i32
    return %c0_i32, %c0_i32_0 : i32, i32
  }
  func.func @transform_3(%arg0: i32) -> (i32, i32, i32) {
    %c0_i32 = arith.constant 0 : i32
    %c0_i32_0 = arith.constant 0 : i32
    %c0_i32_1 = arith.constant 0 : i32
    return %arg0, %c0_i32, %c0_i32_0 : i32, i32, i32
  }
}

</mosaic_0001>

<llo_original>
// kernel: tpu_custom_call.1
$region0: #{tpu_custom_call.1}
  #allocation0 [shape = 'u32[]', space=smem, size = 0x4, offset = 0x4, fixed_abs, tag = 'smem constant byte address 0x4 - core index']
  #allocation1 [shape = 'u32[144,128]{1,0:T(1,128)}', space=vmem, size = 0x12000, scoped, tag = 'internal scratch']
  %s0 = inlined_call_operand.vmem [shape: bf16[2,90,16], index: 0, kind: input, shape index: {}]
  %s1 = inlined_call_operand.vmem [shape: bf16[4,16,128], index: 1, kind: input, shape index: {}]
  %s2 = inlined_call_operand.vmem [shape: f32[1,128], index: 2, kind: input, shape index: {}]
  %s3 = inlined_call_operand.hbm [shape: bf16[2,72,128], index: 3, kind: output, shape index: {}]
  %s4 = sld [smem:[#allocation0]]
  $region45: #{tpu_custom_call.1} parent=0
    _
  %s6 = ssub.s32 1, %s4
  %s7 = scalar_select 0, %s6, %s4
  $region1: #{tpu_custom_call.1} parent=0
    #allocation2 [shape = 'u8[36864]{0}', space=vmem, size = 0x9000, scoped, tag = 'output window, operand 0']
    #allocation3 [shape = 's32[2]{0}', space=sflag, size = 0x8, scoped, tag = 'scoped memory for tpu_custom_call.1']
    %8 = vsyncpa [#allocation3], 0
    %s9 = scalar_lea.sflag [#allocation3], 1
    %10 = vsyncpa %s9, 0
    loop: start=0, step=1, limit=4
    $region2: #{tpu_custom_call.1} parent=1 // loop_pre_header
      _
    $region3: #{tpu_custom_call.1} parent=1 // loop_header
      %s12 = sphi 0, %s16
      %p13 = scmp.ge.s32.totalorder %s12, 4
      %s22 = sphi 0, %s24
      %s25 = sphi 0, %s22
      %s26 = sphi 0, %s25
      %s42 = sphi 0, %s26
      %s46 = sphi 0, %s46
      %s48 = sphi 0, %s46
      %s49 = sphi 0, %s48
      %s63 = sphi 0, %s49
      %s67 = sphi 0, %s67
      %s69 = sphi 0, %s67
      %s70 = sphi 0, %s69
      %s84 = sphi 0, %s70
      %s90 = sphi 0, %s92
      %s93 = sphi 0, %s90
      %s94 = sphi 0, %s93
      %s110 = sphi 0, %s94
    $region4: #{tpu_custom_call.1} parent=1 // loop_header_branch
      %15 = sbr.rel (%p13) target = $region8
    $region5: #{tpu_custom_call.1} parent=1 // loop_body
      %s17 = ssub.s32 %s12, 1
      %s18 = ssub.s32 %s12, 2
      %s19 = sadd.s32 %s12, 1
      %s20 = ssub.s32 %s12, %s19
      %p21 = scmp.eq.s32.totalorder %s20, 0
      %s23 = sadd.s32 %s22, 1
      %s24 = scalar_select %p21, %s22, %s23
      %p27 = pneg %p21
      %p28 = scmp.eq.s32.totalorder %s12, 1
      %p29 = por %p27, %p28
      %p30 = scmp.ne.s32.totalorder %s22, %s25
      %p31 = scmp.eq.s32.totalorder %s12, 0
      %p32 = por %p30, %p31
      %p33 = scmp.ne.s32.totalorder %s22, %s25
      %p34 = scmp.eq.s32.totalorder %s17, 1
      %p35 = por %p33, %p34
      %p36 = scmp.ne.s32.totalorder %s25, %s26
      %p37 = scmp.eq.s32.totalorder %s17, 0
      %p38 = por %p36, %p37
      %p39 = scmp.ne.s32.totalorder %s25, %s26
      %p40 = scmp.eq.s32.totalorder %s18, 1
      %p41 = por %p39, %p40
      %p43 = scmp.ne.s32.totalorder %s26, %s42
      %p44 = scmp.eq.s32.totalorder %s18, 0
      %p45 = por %p43, %p44
      %s47 = sadd.s32 %s46, 1
      %p50 = scmp.eq.s32.totalorder %s12, 1
      %p51 = scmp.ne.s32.totalorder %s46, %s48
      %p52 = scmp.eq.s32.totalorder %s12, 0
      %p53 = por %p51, %p52
      %p54 = scmp.ne.s32.totalorder %s46, %s48
      %p55 = scmp.eq.s32.totalorder %s17, 1
      %p56 = por %p54, %p55
      %p57 = scmp.ne.s32.totalorder %s48, %s49
      %p58 = scmp.eq.s32.totalorder %s17, 0
      %p59 = por %p57, %p58
      %p60 = scmp.ne.s32.totalorder %s48, %s49
      %p61 = scmp.eq.s32.totalorder %s18, 1
      %p62 = por %p60, %p61
      %p64 = scmp.ne.s32.totalorder %s49, %s63
      %p65 = scmp.eq.s32.totalorder %s18, 0
      %p66 = por %p64, %p65
      %s68 = sadd.s32 %s67, 1
      %p71 = scmp.eq.s32.totalorder %s12, 1
      %p72 = scmp.ne.s32.totalorder %s67, %s69
      %p73 = scmp.eq.s32.totalorder %s12, 0
      %p74 = por %p72, %p73
      %p75 = scmp.ne.s32.totalorder %s67, %s69
      %p76 = scmp.eq.s32.totalorder %s17, 1
      %p77 = por %p75, %p76
      %p78 = scmp.ne.s32.totalorder %s69, %s70
      %p79 = scmp.eq.s32.totalorder %s17, 0
      %p80 = por %p78, %p79
      %p81 = scmp.ne.s32.totalorder %s69, %s70
      %p82 = scmp.eq.s32.totalorder %s18, 1
      %p83 = por %p81, %p82
      %p85 = scmp.ne.s32.totalorder %s70, %s84
      %p86 = scmp.eq.s32.totalorder %s18, 0
      %p87 = por %p85, %p86
      %s88 = ssub.s32 %s12, %s19
      %p89 = scmp.eq.s32.totalorder %s88, 0
      %s91 = sadd.s32 %s90, 1
      %s92 = scalar_select %p89, %s90, %s91
      %p95 = pneg %p89
      %p96 = scmp.eq.s32.totalorder %s12, 1
      %p97 = por %p95, %p96
      %p98 = scmp.ne.s32.totalorder %s90, %s93
      %p99 = scmp.eq.s32.totalorder %s12, 0
      %p100 = por %p98, %p99
      %p101 = scmp.ne.s32.totalorder %s90, %s93
      %p102 = scmp.eq.s32.totalorder %s17, 1
      %p103 = por %p101, %p102
      %p104 = scmp.ne.s32.totalorder %s93, %s94
      %p105 = scmp.eq.s32.totalorder %s17, 0
      %p106 = por %p104, %p105
      %p107 = scmp.ne.s32.totalorder %s93, %s94
      %p108 = scmp.eq.s32.totalorder %s18, 1
      %p109 = por %p107, %p108
      %p111 = scmp.ne.s32.totalorder %s94, %s110
      %p112 = scmp.eq.s32.totalorder %s18, 0
      %p113 = por %p111, %p112
      %p114 = scmp.le.s32.totalorder 1, %s12
      %p115 = scmp.lt.s32.totalorder %s12, 3
      %p116 = pnand %p114, %p115
      %p117 = pneg %p116
      // Predicated region
      $region9: #{tpu_custom_call.1} parent=5 // pred_check
        _
      $region10: #{tpu_custom_call.1} parent=5 // pred_check_branch
        %119 = sbr.rel (%p116) target = $region12
      $region11: #{tpu_custom_call.1} parent=5 // pred_region
        %s120 = ssub.s32 %s12, 1
        // Predicated region
        $region13: #{tpu_custom_call.1} parent=11 // pred_check
          %p121 = pneg %p59
        $region14: #{tpu_custom_call.1} parent=11 // pred_check_branch
          %123 = sbr.rel (%p121) target = $region16
        $region15: #{tpu_custom_call.1} parent=11 // pred_region
          _
        $region16: #{tpu_custom_call.1} parent=11 // pred_fallthru
          _
        // Predicated region
        $region17: #{tpu_custom_call.1} parent=11 // pred_check
          %p124 = pneg %p80
        $region18: #{tpu_custom_call.1} parent=11 // pred_check_branch
          %126 = sbr.rel (%p124) target = $region20
        $region19: #{tpu_custom_call.1} parent=11 // pred_region
          _
        $region20: #{tpu_custom_call.1} parent=11 // pred_fallthru
          _
      $region12: #{tpu_custom_call.1} parent=5 // pred_fallthru
        _
      %p127 = scmp.lt.s32.totalorder %s12, 2
      // Predicated region
      $region21: #{tpu_custom_call.1} parent=5 // pred_check
        %p128 = pneg %p127
      $region22: #{tpu_custom_call.1} parent=5 // pred_check_branch
        %130 = sbr.rel (%p128) target = $region24
      $region23: #{tpu_custom_call.1} parent=5 // pred_region
        // Predicated region
        $region25: #{tpu_custom_call.1} parent=23 // pred_check
          %p131 = pneg %p32
        $region26: #{tpu_custom_call.1} parent=23 // pred_check_branch
          %133 = sbr.rel (%p131) target = $region28
        $region27: #{tpu_custom_call.1} parent=23 // pred_region
          %p134 = scmp.lt.s32.totalorder %s12, 1
          %s135 = scalar_select %p134, %s12, 1
          %s136 = smul.addr %s135, 12
          %s137 = smul.addr %s136, 4
          %s138 = scalar_lea.vmem %s0, %s137
        $region28: #{tpu_custom_call.1} parent=23 // pred_fallthru
          _
      $region24: #{tpu_custom_call.1} parent=5 // pred_fallthru
        _
      %p139 = scmp.le.s32.totalorder 1, %s12
      %p140 = scmp.lt.s32.totalorder %s12, 3
      %p141 = pnand %p139, %p140
      %p142 = pneg %p141
      // Predicated region
      $region29: #{tpu_custom_call.1} parent=5 // pred_check
        _
      $region30: #{tpu_custom_call.1} parent=5 // pred_check_branch
        %144 = sbr.rel (%p141) target = $region32
      $region31: #{tpu_custom_call.1} parent=5 // pred_region
        %s145 = ssub.s32 %s12, 1
        %p146 = scmp.lt.s32.totalorder %s17, 1
        %s147 = scalar_select %p146, %s17, 1
        %s148 = smul.addr %s147, 12
        %s149 = smul.addr %s148, 4
        %s150 = scalar_lea.vmem %s0, %s149
        %p151 = pneg %p38
        %p152 = pneg %p35
        %p153 = pneg %p59
        %p154 = pneg %p56
        %p155 = pneg %p80
        %p156 = pneg %p77
        %p157 = pneg %p106
        %p158 = pneg %p103
        %s159 = sand.u32 %s93, 1
        %s160 = scalar_lea.sflag [#allocation3], %s159
        %s161 = sand.u32 %s93, 1
        %s162 = smul.addr %s161, 36
        %s163 = scalar_lea.vmem [#allocation2], %s162
        %p164 = scmp.lt.s32.totalorder %s17, 1
        %s165 = scalar_select %p164, %s17, 1
        %s166 = smul.addr %s165, 12
        %s167 = smul.addr %s166, 4
        %s168 = scalar_lea.vmem %s0, %s167
        %v170 = vld [vmem:[%s168] sm:$0xf]
        %v171 = vld [vmem:[%s168 + $0x4] sm:$0xf]
        %v172 = vld [vmem:[%s168 + $0x8] sm:$0xf]
        %v173 = vld [vmem:[%s168 + $0xc] sm:$0xf]
        %v174 = vld [vmem:[%s168 + $0x10] sm:$0xf]
        %v175 = vld [vmem:[%s168 + $0x14] sm:$0xf]
        %v176 = vld [vmem:[%s168 + $0x18] sm:$0xf]
        %v177 = vld [vmem:[%s168 + $0x1c] sm:$0xf]
        %v178 = vld [vmem:[%s168 + $0x20] sm:$0xf]
        %v179 = vld [vmem:[%s1] sm:$0xf]
        %v180 = vld [vmem:[%s1 + $0x4] sm:$0xf]
        %v181 = vld [vmem:[%s168 + $0x24] sm:$0x1]
        %s182 = scalar_lea.vmem %s1, 8
        %v183 = vld [vmem:[%s182] sm:$0xf]
        %v184 = vld [vmem:[%s182 + $0x4] sm:$0xf]
        %v195 = vunpack.c.l.b16 %v170
        %v196 = vunpack.c.l.b16 %v171
        %v197 = vunpack.c.l.b16 %v172
        %v198 = vunpack.c.l.b16 %v173
        %v199 = vunpack.c.l.b16 %v174
        %v200 = vunpack.c.l.b16 %v175
        %v201 = vunpack.c.l.b16 %v176
        %v202 = vunpack.c.l.b16 %v177
        %v203 = vunpack.c.l.b16 %v178
        %v204 = vunpack.c.l.b16 %v181
        %v205 = vpack.c.b16 %v196, %v195
        %v206 = vpack.c.b16 %v198, %v197
        %v207 = vpack.c.b16 %v200, %v199
        %v208 = vpack.c.b16 %v202, %v201
        %v209 = vpack.c.b16 %v204, %v203
        %vm210 = vsmask.f32 7424
        %v212 = vshrl.u32 %v205, 16
        %v214 = vshll.u32 %v205, 16
        %v216 = vrot.slane %v214, 1
        %v217 = vor.u32 %v212, %v216
        %v219 = vshll.u32 %v206, 16
        %v221 = vrot.slane %v219, 1
        %v222 = vsel %vm210, %v217, %v221
        %v223 = vshrl.u32 %v206, 16
        %v225 = vor.u32 %v223, %v221
        %v227 = vshll.u32 %v207, 16
        %v229 = vrot.slane %v227, 1
        %v230 = vsel %vm210, %v225, %v229
        %v231 = vshrl.u32 %v207, 16
        %v233 = vor.u32 %v231, %v229
        %v235 = vshll.u32 %v208, 16
        %v237 = vrot.slane %v235, 1
        %v238 = vsel %vm210, %v233, %v237
        %v239 = vshrl.u32 %v208, 16
        %v241 = vor.u32 %v239, %v237
        %v243 = vshll.u32 %v209, 16
        %v245 = vrot.slane %v243, 1
        %v246 = vsel %vm210, %v241, %v245
        %v247 = vshrl.u32 %v209, 16
        %v249 = vor.u32 %v247, %v245
        %v252 = vunpack.c.l.b16 %v183
        %v253 = vunpack.c.l.b16 %v184
        %v254 = vpack.c.b16 %v253, %v252
        %vm256 = vcmask 130048
        %v258 = vsel %vm256, %v222, 0
        %v261 = vsel %vm256, %v230, 0
        %v264 = vsel %vm256, %v238, 0
        %v267 = vsel %vm256, %v246, 0
        %v270 = vsel %vm256, %v249, 0
        %272 = vmatprep.subr.bf16.mxu0 0
        %273 = vmatpush1.bf16.msra.mxu0 %v254
        %274 = vmatprep.subr.bf16.mxu0 0
        %275 = vmatpush1.bf16.msra.mxu0 0
        %276 = vmatprep.subr.bf16.mxu0 0
        %277 = vmatpush1.bf16.msra.mxu0 0
        %278 = vmatprep.subr.bf16.mxu0 0
        %279 = vmatpush1.bf16.msra.mxu0 0
        %280 = vmatprep.subr.bf16.mxu0 0
        %281 = vmatpush1.bf16.msra.mxu0 0
        %282 = vmatprep.subr.bf16.mxu0 0
        %283 = vmatpush1.bf16.msra.mxu0 0
        %284 = vmatprep.subr.bf16.mxu0 0
        %285 = vmatpush1.bf16.msra.mxu0 0
        %286 = vmatprep.subr.bf16.mxu0 0
        %287 = vmatpush1.bf16.msra.mxu0 0
        %288 = vmatprep.subr.bf16.mxu0 0
        %289 = vmatpush1.bf16.msra.mxu0 0
        %290 = vmatprep.subr.bf16.mxu0 0
        %291 = vmatpush1.bf16.msra.mxu0 0
        %292 = vmatprep.subr.bf16.mxu0 0
        %293 = vmatpush1.bf16.msra.mxu0 0
        %294 = vmatprep.subr.bf16.mxu0 0
        %295 = vmatpush1.bf16.msra.mxu0 0
        %296 = vmatprep.subr.bf16.mxu0 0
        %297 = vmatpush1.bf16.msra.mxu0 0
        %298 = vmatprep.subr.bf16.mxu0 0
        %299 = vmatpush1.bf16.msra.mxu0 0
        %300 = vmatprep.subr.bf16.mxu0 0
        %301 = vmatpush1.bf16.msra.mxu0 0
        %302 = vmatprep.subr.bf16.mxu0 0
        %303 = vmatpush1.bf16.msra.mxu0 0
        %304 = vmatprep.mubr.bf16.mxu0 0
        %305 = vmatmul.mubr.bf16.gmra.mrb[0].mxu0 %v258
        %v306 = vpop.f32.mrb[0].mxu0
        %v307 = vadd.f32 0.0, %v306
        %v308 = vpop.f32.mrb[0].mxu0
        %v309 = vpop.f32.mrb[0].mxu0
        %v310 = vadd.f32 0.0, %v309
        %v311 = vpop.f32.mrb[0].mxu0
        %312 = vmatprep.mubr.bf16.mxu0 0
        %313 = vmatmul.mubr.bf16.gmra.mrb[0].mxu0 %v261
        %v314 = vpop.f32.mrb[0].mxu0
        %v315 = vadd.f32 0.0, %v314
        %v316 = vpop.f32.mrb[0].mxu0
        %v317 = vpop.f32.mrb[0].mxu0
        %v318 = vadd.f32 0.0, %v317
        %v319 = vpop.f32.mrb[0].mxu0
        %320 = vmatprep.mubr.bf16.mxu0 0
        %321 = vmatmul.mubr.bf16.gmra.mrb[0].mxu0 %v264
        %v322 = vpop.f32.mrb[0].mxu0
        %v323 = vadd.f32 0.0, %v322
        %v324 = vpop.f32.mrb[0].mxu0
        %v325 = vpop.f32.mrb[0].mxu0
        %v326 = vadd.f32 0.0, %v325
        %v327 = vpop.f32.mrb[0].mxu0
        %328 = vmatprep.mubr.bf16.mxu0 0
        %329 = vmatmul.mubr.bf16.gmra.mrb[0].mxu0 %v267
        %v330 = vpop.f32.mrb[0].mxu0
        %v331 = vadd.f32 0.0, %v330
        %v332 = vpop.f32.mrb[0].mxu0
        %v333 = vpop.f32.mrb[0].mxu0
        %v334 = vadd.f32 0.0, %v333
        %v335 = vpop.f32.mrb[0].mxu0
        %336 = vmatprep.mubr.bf16.mxu0 0
        %337 = vmatmul.mubr.bf16.gmra.mrb[0].mxu0 %v270
        %v338 = vpop.f32.mrb[0].mxu0
        %v339 = vadd.f32 0.0, %v338
        %v340 = vpop.f32.mrb[0].mxu0
        %v341 = vpop.f32.mrb[0].mxu0
        %v342 = vpop.f32.mrb[0].mxu0
        %343 = vdwg.mxu0
        %v344 = vpack.c.b16 %v203, %v203
        %v347 = vunpack.c.l.b16 %v179
        %v348 = vunpack.c.l.b16 %v180
        %v349 = vpack.c.b16 %v348, %v347
        %v351 = vsel %vm256, %v205, 0
        %v353 = vsel %vm256, %v206, 0
        %v355 = vsel %vm256, %v207, 0
        %v357 = vsel %vm256, %v208, 0
        %v360 = vsel %vm256, %v344, 0
        %362 = vmatprep.subr.bf16.mxu0 0
        %363 = vmatpush1.bf16.msra.mxu0 %v349
        %364 = vmatprep.subr.bf16.mxu0 0
        %365 = vmatpush1.bf16.msra.mxu0 0
        %366 = vmatprep.subr.bf16.mxu0 0
        %367 = vmatpush1.bf16.msra.mxu0 0
        %368 = vmatprep.subr.bf16.mxu0 0
        %369 = vmatpush1.bf16.msra.mxu0 0
        %370 = vmatprep.subr.bf16.mxu0 0
        %371 = vmatpush1.bf16.msra.mxu0 0
        %372 = vmatprep.subr.bf16.mxu0 0
        %373 = vmatpush1.bf16.msra.mxu0 0
        %374 = vmatprep.subr.bf16.mxu0 0
        %375 = vmatpush1.bf16.msra.mxu0 0
        %376 = vmatprep.subr.bf16.mxu0 0
        %377 = vmatpush1.bf16.msra.mxu0 0
        %378 = vmatprep.subr.bf16.mxu0 0
        %379 = vmatpush1.bf16.msra.mxu0 0
        %380 = vmatprep.subr.bf16.mxu0 0
        %381 = vmatpush1.bf16.msra.mxu0 0
        %382 = vmatprep.subr.bf16.mxu0 0
        %383 = vmatpush1.bf16.msra.mxu0 0
        %384 = vmatprep.subr.bf16.mxu0 0
        %385 = vmatpush1.bf16.msra.mxu0 0
        %386 = vmatprep.subr.bf16.mxu0 0
        %387 = vmatpush1.bf16.msra.mxu0 0
        %388 = vmatprep.subr.bf16.mxu0 0
        %389 = vmatpush1.bf16.msra.mxu0 0
        %390 = vmatprep.subr.bf16.mxu0 0
        %391 = vmatpush1.bf16.msra.mxu0 0
        %392 = vmatprep.subr.bf16.mxu0 0
        %393 = vmatpush1.bf16.msra.mxu0 0
        %394 = vmatprep.mubr.bf16.mxu0 0
        %395 = vmatmul.mubr.bf16.gmra.mrb[0].mxu0 %v351
        %v396 = vpop.f32.mrb[0].mxu0
        %v397 = vadd.f32 %v307, %v396
        %v398 = vpop.f32.mrb[0].mxu0
        %v399 = vpop.f32.mrb[0].mxu0
        %v400 = vadd.f32 %v310, %v399
        %v401 = vpop.f32.mrb[0].mxu0
        %402 = vmatprep.mubr.bf16.mxu0 0
        %403 = vmatmul.mubr.bf16.gmra.mrb[0].mxu0 %v353
        %v404 = vpop.f32.mrb[0].mxu0
        %v405 = vadd.f32 %v315, %v404
        %v406 = vpop.f32.mrb[0].mxu0
        %v407 = vpop.f32.mrb[0].mxu0
        %v408 = vadd.f32 %v318, %v407
        %v409 = vpop.f32.mrb[0].mxu0
        %410 = vmatprep.mubr.bf16.mxu0 0
        %411 = vmatmul.mubr.bf16.gmra.mrb[0].mxu0 %v355
        %v412 = vpop.f32.mrb[0].mxu0
        %v413 = vadd.f32 %v323, %v412
        %v414 = vpop.f32.mrb[0].mxu0
        %v415 = vpop.f32.mrb[0].mxu0
        %v416 = vadd.f32 %v326, %v415
        %v417 = vpop.f32.mrb[0].mxu0
        %418 = vmatprep.mubr.bf16.mxu0 0
        %419 = vmatmul.mubr.bf16.gmra.mrb[0].mxu0 %v357
        %v420 = vpop.f32.mrb[0].mxu0
        %v421 = vadd.f32 %v331, %v420
        %v422 = vpop.f32.mrb[0].mxu0
        %v423 = vpop.f32.mrb[0].mxu0
        %v424 = vadd.f32 %v334, %v423
        %v425 = vpop.f32.mrb[0].mxu0
        %426 = vmatprep.mubr.bf16.mxu0 0
        %427 = vmatmul.mubr.bf16.gmra.mrb[0].mxu0 %v360
        %v428 = vpop.f32.mrb[0].mxu0
        %v429 = vadd.f32 %v339, %v428
        %v430 = vpop.f32.mrb[0].mxu0
        %v431 = vpop.f32.mrb[0].mxu0
        %v432 = vpop.f32.mrb[0].mxu0
        %433 = vdwg.mxu0
        %v434 = vld [vmem:[%s168 + $0x4] sm:$0xf]
        %v435 = vld [vmem:[%s168 + $0x8] sm:$0xf]
        %v436 = vld [vmem:[%s168 + $0xc] sm:$0xf]
        %v437 = vld [vmem:[%s168 + $0x10] sm:$0xf]
        %v438 = vld [vmem:[%s168 + $0x14] sm:$0xf]
        %v439 = vld [vmem:[%s168 + $0x18] sm:$0xf]
        %v440 = vld [vmem:[%s168 + $0x1c] sm:$0xf]
        %v441 = vld [vmem:[%s168 + $0x20] sm:$0xf]
        %v442 = vld [vmem:[%s168 + $0x24] sm:$0xf]
        %v443 = vld [vmem:[%s168 + $0x28] sm:$0x1]
        %s444 = scalar_lea.vmem %s1, 16
        %v445 = vld [vmem:[%s444] sm:$0xf]
        %v446 = vld [vmem:[%s444 + $0x4] sm:$0xf]
        %v457 = vunpack.c.l.b16 %v434
        %v458 = vunpack.c.l.b16 %v435
        %v459 = vunpack.c.l.b16 %v436
        %v460 = vunpack.c.l.b16 %v437
        %v461 = vunpack.c.l.b16 %v438
        %v462 = vunpack.c.l.b16 %v439
        %v463 = vunpack.c.l.b16 %v440
        %v464 = vunpack.c.l.b16 %v441
        %v465 = vunpack.c.l.b16 %v442
        %v466 = vunpack.c.l.b16 %v443
        %v467 = vpack.c.b16 %v458, %v457
        %v468 = vpack.c.b16 %v460, %v459
        %v469 = vpack.c.b16 %v462, %v461
        %v470 = vpack.c.b16 %v464, %v463
        %v471 = vpack.c.b16 %v466, %v465
        %v473 = vshrl.u32 %v467, 16
        %v475 = vshll.u32 %v467, 16
        %v477 = vrot.slane %v475, 1
        %v478 = vor.u32 %v473, %v477
        %v480 = vshll.u32 %v468, 16
        %v482 = vrot.slane %v480, 1
        %v483 = vsel %vm210, %v478, %v482
        %v484 = vshrl.u32 %v468, 16
        %v486 = vor.u32 %v484, %v482
        %v488 = vshll.u32 %v469, 16
        %v490 = vrot.slane %v488, 1
        %v491 = vsel %vm210, %v486, %v490
        %v492 = vshrl.u32 %v469, 16
        %v494 = vor.u32 %v492, %v490
        %v496 = vshll.u32 %v470, 16
        %v498 = vrot.slane %v496, 1
        %v499 = vsel %vm210, %v494, %v498
        %v500 = vshrl.u32 %v470, 16
        %v502 = vor.u32 %v500, %v498
        %v504 = vshll.u32 %v471, 16
        %v506 = vrot.slane %v504, 1
        %v507 = vsel %vm210, %v502, %v506
        %v508 = vshrl.u32 %v471, 16
        %v510 = vor.u32 %v508, %v506
        %v513 = vunpack.c.l.b16 %v445
        %v514 = vunpack.c.l.b16 %v446
        %v515 = vpack.c.b16 %v514, %v513
        %v518 = vsel %vm256, %v483, 0
        %v521 = vsel %vm256, %v491, 0
        %v524 = vsel %vm256, %v499, 0
        %v527 = vsel %vm256, %v507, 0
        %v530 = vsel %vm256, %v510, 0
        %532 = vmatprep.subr.bf16.mxu0 0
        %533 = vmatpush1.bf16.msra.mxu0 %v515
        %534 = vmatprep.subr.bf16.mxu0 0
        %535 = vmatpush1.bf16.msra.mxu0 0
        %536 = vmatprep.subr.bf16.mxu0 0
        %537 = vmatpush1.bf16.msra.mxu0 0
        %538 = vmatprep.subr.bf16.mxu0 0
        %539 = vmatpush1.bf16.msra.mxu0 0
        %540 = vmatprep.subr.bf16.mxu0 0
        %541 = vmatpush1.bf16.msra.mxu0 0
        %542 = vmatprep.subr.bf16.mxu0 0
        %543 = vmatpush1.bf16.msra.mxu0 0
        %544 = vmatprep.subr.bf16.mxu0 0
        %545 = vmatpush1.bf16.msra.mxu0 0
        %546 = vmatprep.subr.bf16.mxu0 0
        %547 = vmatpush1.bf16.msra.mxu0 0
        %548 = vmatprep.subr.bf16.mxu0 0
        %549 = vmatpush1.bf16.msra.mxu0 0
        %550 = vmatprep.subr.bf16.mxu0 0
        %551 = vmatpush1.bf16.msra.mxu0 0
        %552 = vmatprep.subr.bf16.mxu0 0
        %553 = vmatpush1.bf16.msra.mxu0 0
        %554 = vmatprep.subr.bf16.mxu0 0
        %555 = vmatpush1.bf16.msra.mxu0 0
        %556 = vmatprep.subr.bf16.mxu0 0
        %557 = vmatpush1.bf16.msra.mxu0 0
        %558 = vmatprep.subr.bf16.mxu0 0
        %559 = vmatpush1.bf16.msra.mxu0 0
        %560 = vmatprep.subr.bf16.mxu0 0
        %561 = vmatpush1.bf16.msra.mxu0 0
        %562 = vmatprep.subr.bf16.mxu0 0
        %563 = vmatpush1.bf16.msra.mxu0 0
        %564 = vmatprep.mubr.bf16.mxu0 0
        %565 = vmatmul.mubr.bf16.gmra.mrb[0].mxu0 %v518
        %v566 = vpop.f32.mrb[0].mxu0
        %v567 = vadd.f32 0.0, %v566
        %v568 = vpop.f32.mrb[0].mxu0
        %v569 = vpop.f32.mrb[0].mxu0
        %v570 = vadd.f32 0.0, %v569
        %v571 = vpop.f32.mrb[0].mxu0
        %572 = vmatprep.mubr.bf16.mxu0 0
        %573 = vmatmul.mubr.bf16.gmra.mrb[0].mxu0 %v521
        %v574 = vpop.f32.mrb[0].mxu0
        %v575 = vadd.f32 0.0, %v574
        %v576 = vpop.f32.mrb[0].mxu0
        %v577 = vpop.f32.mrb[0].mxu0
        %v578 = vadd.f32 0.0, %v577
        %v579 = vpop.f32.mrb[0].mxu0
        %580 = vmatprep.mubr.bf16.mxu0 0
        %581 = vmatmul.mubr.bf16.gmra.mrb[0].mxu0 %v524
        %v582 = vpop.f32.mrb[0].mxu0
        %v583 = vadd.f32 0.0, %v582
        %v584 = vpop.f32.mrb[0].mxu0
        %v585 = vpop.f32.mrb[0].mxu0
        %v586 = vadd.f32 0.0, %v585
        %v587 = vpop.f32.mrb[0].mxu0
        %588 = vmatprep.mubr.bf16.mxu0 0
        %589 = vmatmul.mubr.bf16.gmra.mrb[0].mxu0 %v527
        %v590 = vpop.f32.mrb[0].mxu0
        %v591 = vadd.f32 0.0, %v590
        %v592 = vpop.f32.mrb[0].mxu0
        %v593 = vpop.f32.mrb[0].mxu0
        %v594 = vadd.f32 0.0, %v593
        %v595 = vpop.f32.mrb[0].mxu0
        %596 = vmatprep.mubr.bf16.mxu0 0
        %597 = vmatmul.mubr.bf16.gmra.mrb[0].mxu0 %v530
        %v598 = vpop.f32.mrb[0].mxu0
        %v599 = vadd.f32 0.0, %v598
        %v600 = vpop.f32.mrb[0].mxu0
        %v601 = vpop.f32.mrb[0].mxu0
        %v602 = vpop.f32.mrb[0].mxu0
        %603 = vdwg.mxu0
        %v604 = vadd.f32 %v397, %v567
        %v605 = vadd.f32 %v400, %v570
        %v606 = vadd.f32 %v405, %v575
        %v607 = vadd.f32 %v408, %v578
        %v608 = vadd.f32 %v413, %v583
        %v609 = vadd.f32 %v416, %v586
        %v610 = vadd.f32 %v421, %v591
        %v611 = vadd.f32 %v424, %v594
        %v612 = vadd.f32 %v429, %v599
        %v613 = vld [vmem:[%s168 + $0x4] sm:$0xe]
        %s614 = scalar_lea.vmem %s1, 24
        %v615 = vld [vmem:[%s614] sm:$0xf]
        %v616 = vld [vmem:[%s614 + $0x4] sm:$0xf]
        %v618 = vunpack.c.l.b16 %v613
        %v619 = vpack.c.b16 %v458, %v618
        %vm620 = vcmask 1046528
        %v621 = vrot.slane %v619, 1
        %v622 = vrot.slane %v468, 1
        %v623 = vsel %vm620, %v621, %v622
        %v624 = vrot.slane %v469, 1
        %v625 = vsel %vm620, %v622, %v624
        %v626 = vrot.slane %v470, 1
        %v627 = vsel %vm620, %v624, %v626
        %v628 = vrot.slane %v471, 1
        %v629 = vsel %vm620, %v626, %v628
        %v632 = vunpack.c.l.b16 %v615
        %v633 = vunpack.c.l.b16 %v616
        %v634 = vpack.c.b16 %v633, %v632
        %v637 = vsel %vm256, %v623, 0
        %v640 = vsel %vm256, %v625, 0
        %v643 = vsel %vm256, %v627, 0
        %v646 = vsel %vm256, %v629, 0
        %v649 = vsel %vm256, %v628, 0
        %651 = vmatprep.subr.bf16.mxu0 0
        %652 = vmatpush1.bf16.msra.mxu0 %v634
        %653 = vmatprep.subr.bf16.mxu0 0
        %654 = vmatpush1.bf16.msra.mxu0 0
        %655 = vmatprep.subr.bf16.mxu0 0
        %656 = vmatpush1.bf16.msra.mxu0 0
        %657 = vmatprep.subr.bf16.mxu0 0
        %658 = vmatpush1.bf16.msra.mxu0 0
        %659 = vmatprep.subr.bf16.mxu0 0
        %660 = vmatpush1.bf16.msra.mxu0 0
        %661 = vmatprep.subr.bf16.mxu0 0
        %662 = vmatpush1.bf16.msra.mxu0 0
        %663 = vmatprep.subr.bf16.mxu0 0
        %664 = vmatpush1.bf16.msra.mxu0 0
        %665 = vmatprep.subr.bf16.mxu0 0
        %666 = vmatpush1.bf16.msra.mxu0 0
        %667 = vmatprep.subr.bf16.mxu0 0
        %668 = vmatpush1.bf16.msra.mxu0 0
        %669 = vmatprep.subr.bf16.mxu0 0
        %670 = vmatpush1.bf16.msra.mxu0 0
        %671 = vmatprep.subr.bf16.mxu0 0
        %672 = vmatpush1.bf16.msra.mxu0 0
        %673 = vmatprep.subr.bf16.mxu0 0
        %674 = vmatpush1.bf16.msra.mxu0 0
        %675 = vmatprep.subr.bf16.mxu0 0
        %676 = vmatpush1.bf16.msra.mxu0 0
        %677 = vmatprep.subr.bf16.mxu0 0
        %678 = vmatpush1.bf16.msra.mxu0 0
        %679 = vmatprep.subr.bf16.mxu0 0
        %680 = vmatpush1.bf16.msra.mxu0 0
        %681 = vmatprep.subr.bf16.mxu0 0
        %682 = vmatpush1.bf16.msra.mxu0 0
        %683 = vmatprep.mubr.bf16.mxu0 0
        %684 = vmatmul.mubr.bf16.gmra.mrb[0].mxu0 %v637
        %v685 = vpop.f32.mrb[0].mxu0
        %v686 = vadd.f32 0.0, %v685
        %v687 = vpop.f32.mrb[0].mxu0
        %v688 = vpop.f32.mrb[0].mxu0
        %v689 = vadd.f32 0.0, %v688
        %v690 = vpop.f32.mrb[0].mxu0
        %691 = vmatprep.mubr.bf16.mxu0 0
        %692 = vmatmul.mubr.bf16.gmra.mrb[0].mxu0 %v640
        %v693 = vpop.f32.mrb[0].mxu0
        %v694 = vadd.f32 0.0, %v693
        %v695 = vpop.f32.mrb[0].mxu0
        %v696 = vpop.f32.mrb[0].mxu0
        %v697 = vadd.f32 0.0, %v696
        %v698 = vpop.f32.mrb[0].mxu0
        %699 = vmatprep.mubr.bf16.mxu0 0
        %700 = vmatmul.mubr.bf16.gmra.mrb[0].mxu0 %v643
        %v701 = vpop.f32.mrb[0].mxu0
        %v702 = vadd.f32 0.0, %v701
        %v703 = vpop.f32.mrb[0].mxu0
        %v704 = vpop.f32.mrb[0].mxu0
        %v705 = vadd.f32 0.0, %v704
        %v706 = vpop.f32.mrb[0].mxu0
        %707 = vmatprep.mubr.bf16.mxu0 0
        %708 = vmatmul.mubr.bf16.gmra.mrb[0].mxu0 %v646
        %v709 = vpop.f32.mrb[0].mxu0
        %v710 = vadd.f32 0.0, %v709
        %v711 = vpop.f32.mrb[0].mxu0
        %v712 = vpop.f32.mrb[0].mxu0
        %v713 = vadd.f32 0.0, %v712
        %v714 = vpop.f32.mrb[0].mxu0
        %715 = vmatprep.mubr.bf16.mxu0 0
        %716 = vmatmul.mubr.bf16.gmra.mrb[0].mxu0 %v649
        %v717 = vpop.f32.mrb[0].mxu0
        %v718 = vadd.f32 0.0, %v717
        %v719 = vpop.f32.mrb[0].mxu0
        %v720 = vpop.f32.mrb[0].mxu0
        %v721 = vpop.f32.mrb[0].mxu0
        %722 = vdwg.mxu0
        %v723 = vadd.f32 %v604, %v686
        %v724 = vadd.f32 %v605, %v689
        %v725 = vadd.f32 %v606, %v694
        %v726 = vadd.f32 %v607, %v697
        %v727 = vadd.f32 %v608, %v702
        %v728 = vadd.f32 %v609, %v705
        %v729 = vadd.f32 %v610, %v710
        %v730 = vadd.f32 %v611, %v713
        %v731 = vadd.f32 %v612, %v718
        %v732 = vld [vmem:[%s2] sm:$0x1]
        %v734 = vlaneseq
        %v735 = vshrl.u32 %v734, 7
        %v736 = vsub.s32 0, %v735
        %v737 = vrot.slane %v732, %v736
        %v739 = vadd.f32 %v723, %v737
        %v740 = vadd.f32 %v724, %v737
        %v741 = vadd.f32 %v725, %v737
        %v742 = vadd.f32 %v726, %v737
        %v743 = vadd.f32 %v727, %v737
        %v744 = vadd.f32 %v728, %v737
        %v745 = vadd.f32 %v729, %v737
        %v746 = vadd.f32 %v730, %v737
        %v747 = vadd.f32 %v731, %v737
        %v748 = vxor.u32 %v739, 2147483648
        %v749 = vxor.u32 %v740, 2147483648
        %v750 = vxor.u32 %v741, 2147483648
        %v751 = vxor.u32 %v742, 2147483648
        %v752 = vxor.u32 %v743, 2147483648
        %v753 = vxor.u32 %v744, 2147483648
        %v754 = vxor.u32 %v745, 2147483648
        %v755 = vxor.u32 %v746, 2147483648
        %v756 = vxor.u32 %v747, 2147483648
        %v757 = vmul.f32 %v748, 1.442695
        %v758 = vpow.pop %v757
        %v759 = vmul.f32 %v749, 1.442695
        %v760 = vpow.pop %v759
        %v761 = vmul.f32 %v750, 1.442695
        %v762 = vpow.pop %v761
        %v763 = vmul.f32 %v751, 1.442695
        %v764 = vpow.pop %v763
        %v765 = vmul.f32 %v752, 1.442695
        %v766 = vpow.pop %v765
        %v767 = vmul.f32 %v753, 1.442695
        %v768 = vpow.pop %v767
        %v769 = vmul.f32 %v754, 1.442695
        %v770 = vpow.pop %v769
        %v771 = vmul.f32 %v755, 1.442695
        %v772 = vpow.pop %v771
        %v773 = vmul.f32 %v756, 1.442695
        %v774 = vpow.pop %v773
        %v775 = vadd.f32 %v758, 1.0
        %v776 = vadd.f32 %v760, 1.0
        %v777 = vadd.f32 %v762, 1.0
        %v778 = vadd.f32 %v764, 1.0
        %v779 = vadd.f32 %v766, 1.0
        %v780 = vadd.f32 %v768, 1.0
        %v781 = vadd.f32 %v770, 1.0
        %v782 = vadd.f32 %v772, 1.0
        %v783 = vadd.f32 %v774, 1.0
        %v784 = vrcp.pop %v775
        %v785 = vmul.f32 1.0, %v784
        %v786 = vrcp.pop %v776
        %v787 = vmul.f32 1.0, %v786
        %v788 = vrcp.pop %v777
        %v789 = vmul.f32 1.0, %v788
        %v790 = vrcp.pop %v778
        %v791 = vmul.f32 1.0, %v790
        %v792 = vrcp.pop %v779
        %v793 = vmul.f32 1.0, %v792
        %v794 = vrcp.pop %v780
        %v795 = vmul.f32 1.0, %v794
        %v796 = vrcp.pop %v781
        %v797 = vmul.f32 1.0, %v796
        %v798 = vrcp.pop %v782
        %v799 = vmul.f32 1.0, %v798
        %v800 = vrcp.pop %v783
        %v801 = vmul.f32 1.0, %v800
        %v802 = vmul.f32 %v739, %v785
        %v803 = vmul.f32 %v740, %v787
        %v804 = vmul.f32 %v741, %v789
        %v805 = vmul.f32 %v742, %v791
        %v806 = vmul.f32 %v743, %v793
        %v807 = vmul.f32 %v744, %v795
        %v808 = vmul.f32 %v745, %v797
        %v809 = vmul.f32 %v746, %v799
        %v810 = vmul.f32 %v747, %v801
        %v811 = vpack.c.bf16 %v803, %v802
        %v812 = vpack.c.bf16 %v805, %v804
        %v813 = vpack.c.bf16 %v807, %v806
        %v814 = vpack.c.bf16 %v809, %v808
        %v815 = vpack.c.bf16 %v810, %v810
        %v821 = vunpack.c.l.b16 %v811
        %v822 = vunpack.c.h.b16 %v811
        %v823 = vunpack.c.l.b16 %v812
        %v824 = vunpack.c.h.b16 %v812
        %v825 = vunpack.c.l.b16 %v813
        %v826 = vunpack.c.h.b16 %v813
        %v827 = vunpack.c.l.b16 %v814
        %v828 = vunpack.c.h.b16 %v814
        %v829 = vunpack.c.l.b16 %v815
        %v830 = vpack.c.b16 %v821, %v821
        %v831 = vpack.c.b16 %v822, %v822
        %v832 = vpack.c.b16 %v823, %v823
        %v833 = vpack.c.b16 %v824, %v824
        %v834 = vpack.c.b16 %v825, %v825
        %v835 = vpack.c.b16 %v826, %v826
        %v836 = vpack.c.b16 %v827, %v827
        %v837 = vpack.c.b16 %v828, %v828
        %v838 = vpack.c.b16 %v829, %v829
        %848 = vst [vmem:[%s163] sm:$0xf] %v830
        %849 = vst [vmem:[%s163 + $0x4] sm:$0xf] %v831
        %850 = vst [vmem:[%s163 + $0x8] sm:$0xf] %v832
        %851 = vst [vmem:[%s163 + $0xc] sm:$0xf] %v833
        %852 = vst [vmem:[%s163 + $0x10] sm:$0xf] %v834
        %853 = vst [vmem:[%s163 + $0x14] sm:$0xf] %v835
        %854 = vst [vmem:[%s163 + $0x18] sm:$0xf] %v836
        %855 = vst [vmem:[%s163 + $0x1c] sm:$0xf] %v837
        %856 = vst [vmem:[%s163 + $0x20] sm:$0xf] %v838
        %s857 = sand.u32 %s93, 1
        %s858 = scalar_lea.sflag [#allocation3], %s857
        %s859 = sand.u32 %s93, 1
        %s860 = smul.addr %s859, 36
        %s861 = scalar_lea.vmem [#allocation2], %s860
        // Predicated region
        $region33: #{tpu_custom_call.1} parent=31 // pred_check
          %p862 = pneg %p103
        $region34: #{tpu_custom_call.1} parent=31 // pred_check_branch
          %864 = sbr.rel (%p862) target = $region36
        $region35: #{tpu_custom_call.1} parent=31 // pred_region
          %s866 = ssub.s32 576, 576
          %867 = vsyncadd %s858, %s866
          %s868 = smul.addr %s17, 9
          %s869 = smul.addr %s868, 64
          %s870 = scalar_lea.hbm %s3, %s869
          %s871 = sshll.u32 %s861, 4
          %s872 = int_to_ptr.vmem [resolvable:$true] %s871
          %877 = dma.vmem_to_hbm [thread:$0]  %s872, 576, %s870, %s858, 64, 64, 4
        $region36: #{tpu_custom_call.1} parent=31 // pred_fallthru
          _
      $region32: #{tpu_custom_call.1} parent=5 // pred_fallthru
        _
      %p878 = scmp.le.s32.totalorder 2, %s12
      // Predicated region
      $region37: #{tpu_custom_call.1} parent=5 // pred_check
        %p879 = pneg %p878
      $region38: #{tpu_custom_call.1} parent=5 // pred_check_branch
        %881 = sbr.rel (%p879) target = $region40
      $region39: #{tpu_custom_call.1} parent=5 // pred_region
        %s882 = ssub.s32 %s12, 2
        // Predicated region
        $region41: #{tpu_custom_call.1} parent=39 // pred_check
          %p883 = pneg %p109
        $region42: #{tpu_custom_call.1} parent=39 // pred_check_branch
          %885 = sbr.rel (%p883) target = $region44
        $region43: #{tpu_custom_call.1} parent=39 // pred_region
          %s886 = sand.u32 %s94, 1
          %s887 = scalar_lea.sflag [#allocation3], %s886
          %s888 = sand.u32 %s94, 1
          %s889 = smul.addr %s888, 36
          %s890 = scalar_lea.vmem [#allocation2], %s889
          %891 = dma.done %s887, 576
        $region44: #{tpu_custom_call.1} parent=39 // pred_fallthru
          _
      $region40: #{tpu_custom_call.1} parent=5 // pred_fallthru
        _
    $region6: #{tpu_custom_call.1} parent=1 // loop_footer
      %s16 = sadd.s32 1, %s12
    $region7: #{tpu_custom_call.1} parent=1 // loop_footer_branch
      %11 = sbr.rel target = $region3
    $region8: #{tpu_custom_call.1} parent=1 // loop_exit
      _
    %892 = vsyncpa [#allocation3], 1
    %s893 = scalar_lea.sflag [#allocation3], 1
    %894 = vsyncpa %s893, 1

</llo_original>
